<compile_context>
chip_gen: v6e
topology: v6e:2x2x1
jax: 0.10.0
libtpu: 0.0.40
codegen_flags: <defaults>
</compile_context>

<pallas_src>
import functools
import math

import jax
import jax.numpy as jnp
from jax.experimental import pallas as pl
from jax.experimental.pallas import tpu as pltpu


# ----------------------------------------------------------------------------
# Kernels
# ----------------------------------------------------------------------------
def _ln_mod_kernel(x_ref, w_ref, o_ref, *, eps, inv_nx):
    """General path: one block = (ROW_TILE, nx); per-row reduction on VPU/XLU."""
    x = x_ref[...].astype(jnp.float32)
    w = w_ref[...]                                    # (1, nx), already f32
    mean = jnp.sum(x, axis=-1, keepdims=True) * inv_nx
    ex2 = jnp.sum(x * x, axis=-1, keepdims=True) * inv_nx
    var = jnp.maximum(ex2 - mean * mean, 0.0)         # population var; clamp cancellation
    o_ref[...] = (x * jax.lax.rsqrt(var + eps) * w).astype(o_ref.dtype)


def _ln_mod_packed_kernel(x_ref, w_ref, b_ref, o_ref, *, eps, inv_nx):
    """Lane-packed path: g = width // nx original rows live side-by-side in one
    lane-dense packed row, so loads/stores are full-lane (unmasked vst).
    Segmented per-row sums use a block-diagonal 0/1 matrix in bf16 (exact) and
    a 3-term bf16 decomposition of the data operand -> 3 MXU passes per sum
    (vs. 6 for a Precision.HIGHEST f32 matmul) at ~f32 accuracy."""
    x = x_ref[...].astype(jnp.float32)                # (RT, W)
    w = w_ref[...]                                    # (1, W), f32 (weight tiled g times)
    b = b_ref[...]                                    # (W, W) block-diagonal 0/1, bf16

    def seg_sum(v):
        v_hi = v.astype(jnp.bfloat16)
        r = v - v_hi.astype(jnp.float32)
        v_mid = r.astype(jnp.bfloat16)
        v_lo = (r - v_mid.astype(jnp.float32)).astype(jnp.bfloat16)
        acc = jnp.dot(v_hi, b, preferred_element_type=jnp.float32)
        acc = acc + jnp.dot(v_mid, b, preferred_element_type=jnp.float32)
        acc = acc + jnp.dot(v_lo, b, preferred_element_type=jnp.float32)
        return acc                                     # (RT, W), per-segment sum at every lane

    mean = seg_sum(x) * inv_nx
    ex2 = seg_sum(x * x) * inv_nx
    var = jnp.maximum(ex2 - mean * mean, 0.0)
    o_ref[...] = (x * jax.lax.rsqrt(var + eps) * w).astype(o_ref.dtype)


# ----------------------------------------------------------------------------
# Hardware / tiling helpers
# ----------------------------------------------------------------------------
def _cdiv(a, b):
    return -(-a // b)


def _round_up(a, b):
    return _cdiv(a, b) * b


def _sublane(dtype):
    # f32 -> 8, bf16 -> 16, int8/fp8 -> 32 (sublane packing).
    bits = jnp.dtype(dtype).itemsize * 8
    return max(8, 256 // bits)


def _hw_config():
    """Best-effort (generation, VMEM capacity) detection; never raises."""
    kind = ""
    try:
        kind = jax.devices()[0].device_kind.lower()
    except Exception:
        pass
    if "v5" in kind:
        gen = "v5e"
    elif "v6" in kind:
        gen = "v6e"
    elif "7" in kind:
        gen = "v7x"
    else:
        gen = None
    vmem_cap = None
    try:
        vmem_cap = int(pltpu.get_tpu_info().vmem_capacity_bytes)
    except Exception:
        vmem_cap = None
    if not vmem_cap or vmem_cap <= 0:
        vmem_cap = (64 << 20) if gen == "v7x" else (128 << 20)
    return gen, vmem_cap


def _tile_policy(gen, vmem_cap):
    if gen in ("v5e", "v6e"):
        # 128 MiB VMEM, single TensorCore: big blocks, no minimum-step cap.
        target, budget, limit, min_steps, even = 6 << 20, 80 << 20, 96 << 20, 1, False
    elif gen == "v7x":
        # 64 MiB VMEM, 2 TCs: ~4 MiB blocks, >=8 (even) steps, <=48 MiB asked.
        target, budget, limit, min_steps, even = 4 << 20, 44 << 20, 48 << 20, 8, True
    else:
        # Unknown chip: conservative, derived from whatever VMEM was reported.
        target = 2 << 20
        budget = max(8 << 20, vmem_cap // 3)
        limit = max(16 << 20, vmem_cap // 2)
        min_steps, even = 1, False
    budget = min(budget, max(8 << 20, vmem_cap - (16 << 20)))
    limit = min(limit, max(16 << 20, vmem_cap - (12 << 20)))
    return {"target_block": target, "budget": budget, "vmem_limit": limit,
            "min_steps": min_steps, "even_steps": even}


def _per_row_bytes(width, in_bytes, out_bytes, f32_temps):
    # 2x double-buffered input + 2x double-buffered output + block-sized f32
    # temporaries (E[x^2]-mean^2 formulation: no `d = x - mean` temp).
    return width * (2 * in_bytes + 2 * out_bytes + f32_temps * 4)


def _choose_row_tile(rows, width, in_bytes, out_bytes, sublane, f32_temps, policy):
    if rows <= sublane:
        return int(rows)                               # block == full dim (allowed)
    per_row = _per_row_bytes(width, in_bytes, out_bytes, f32_temps)
    rt = max(sublane, policy["target_block"] // max(1, width * in_bytes))
    rt = min(rt, max(sublane, policy["budget"] // max(1, per_row)))
    if policy["min_steps"] > 1:
        rt = min(rt, max(sublane, rows // policy["min_steps"]))
    rt = min(rt, rows)
    rt = max(sublane, (rt // sublane) * sublane)
    if policy["even_steps"]:
        steps = _cdiv(rows, rt)
        if steps % 2 == 1 and steps < 64:
            # Nudge to an even step count so work splits across both v7x TCs.
            rt_alt = max(sublane, _round_up(_cdiv(rows, steps + 1), sublane))
            if _cdiv(rows, rt_alt) % 2 == 0:
                rt = rt_alt
    return int(rt)


def _vmem_limit_bytes(rt, width, in_bytes, out_bytes, f32_temps, policy):
    need = rt * _per_row_bytes(width, in_bytes, out_bytes, f32_temps) + (2 << 20)
    lo = min(32 << 20, policy["vmem_limit"])
    return int(min(max(need, lo), policy["vmem_limit"]))


# ----------------------------------------------------------------------------
# Wrapper
# ----------------------------------------------------------------------------
def ln_mod_forward(x, weight, eps=1e-05):
    """JAX/Pallas equivalent of ln_mod.forward.

    x:      array of shape (..., nx)
    weight: array of shape (nx,)
    """
    nx = x.shape[-1]
    assert weight.shape == (nx,)

    orig_shape = x.shape
    orig_dtype = x.dtype
    x2 = x.reshape(-1, nx)
    rows = x2.shape[0]

    gen, vmem_cap = _hw_config()
    policy = _tile_policy(gen, vmem_cap)

    w_f32 = weight.astype(jnp.float32)
    in_bytes = jnp.dtype(orig_dtype).itemsize
    out_bytes = in_bytes
    sub = _sublane(orig_dtype)

    # ---------------- lane-dense packing decision ----------------
    # Pack g = lcm(nx,128)//nx rows per 128-multiple-wide packed row whenever
    # the general path's stores would be lane-masked.  Skipped on v5e (weakest
    # MXU / sequential MRF; its HBM is slow enough that masked stores do not
    # bind), per perf review.
    g = 1
    width = nx
    if nx % 128 != 0 and gen != "v5e":
        g_cand = 128 // math.gcd(nx, 128)
        width_cand = g_cand * nx                       # == lcm(nx, 128)
        util_general = nx / (128.0 * _cdiv(nx, 128))
        if width_cand <= 384 and rows >= g_cand and util_general < 0.9:
            g, width = g_cand, width_cand

    if g > 1:
        pad = (-rows) % g
        # TODO(synk): the pad/slice pair for rows % g != 0 costs one extra XLA
        # pass over the data; a fused general-path tail kernel would avoid it.
        x_src = x2 if pad == 0 else jnp.pad(x2, ((0, pad), (0, 0)))
        prows = (rows + pad) // g
        xp = x_src.reshape(prows, width)               # contiguous reshape: free

        f32_temps = 5                                  # x, x*x, split terms, sums
        rt = _choose_row_tile(prows, width, in_bytes, out_bytes, sub, f32_temps, policy)
        grid = (pl.cdiv(prows, rt),)

        wp = jnp.tile(w_f32, g).reshape(1, width)      # weight repeated per segment
        seg = jnp.arange(width, dtype=jnp.int32) // nx
        bmat = (seg[:, None] == seg[None, :]).astype(jnp.bfloat16)  # block-diag 0/1 (exact in bf16)

        out = pl.pallas_call(
            functools.partial(_ln_mod_packed_kernel,
                              eps=float(eps), inv_nx=1.0 / nx),
            out_shape=jax.ShapeDtypeStruct((prows, width), orig_dtype),
            grid_spec=pltpu.PrefetchScalarGridSpec(
                num_scalar_prefetch=0,
                grid=grid,
                in_specs=[
                    # If an xprof trace ever shows exposed input DMA, try
                    # pipeline_mode=pl.Buffered(3) on this spec (v5e/v6e only).
                    pl.BlockSpec((rt, width), lambda i: (i, 0)),
                    pl.BlockSpec((1, width), lambda i: (0, 0)),       # grid-invariant
                    pl.BlockSpec((width, width), lambda i: (0, 0)),   # grid-invariant
                ],
                out_specs=pl.BlockSpec((rt, width), lambda i: (i, 0)),
            ),
            compiler_params=pltpu.CompilerParams(
                dimension_semantics=("parallel",),
                vmem_limit_bytes=_vmem_limit_bytes(
                    rt, width, in_bytes, out_bytes, f32_temps, policy),
            ),
        )(xp, wp, bmat)

        out2 = out.reshape(prows * g, nx)
        if pad:
            out2 = out2[:rows]
        return out2.reshape(orig_shape)

    # ---------------- general path ----------------
    # Block width = full nx; ragged last row-block is masked by Pallas on
    # writeback (safe because the reduction is strictly per-row).
    f32_temps = 3                                      # x_f32, x*x, result
    rt = _choose_row_tile(rows, nx, in_bytes, out_bytes, sub, f32_temps, policy)
    grid = (pl.cdiv(rows, rt),)

    out = pl.pallas_call(
        functools.partial(_ln_mod_kernel, eps=float(eps), inv_nx=1.0 / nx),
        out_shape=jax.ShapeDtypeStruct((rows, nx), orig_dtype),
        grid_spec=pltpu.PrefetchScalarGridSpec(
            num_scalar_prefetch=0,
            grid=grid,
            in_specs=[
                pl.BlockSpec((rt, nx), lambda i: (i, 0)),
                pl.BlockSpec((1, nx), lambda i: (0, 0)),              # grid-invariant
            ],
            out_specs=pl.BlockSpec((rt, nx), lambda i: (i, 0)),
        ),
        compiler_params=pltpu.CompilerParams(
            dimension_semantics=("parallel",),
            vmem_limit_bytes=_vmem_limit_bytes(
                rt, nx, in_bytes, out_bytes, f32_temps, policy),
        ),
    )(x2, w_f32.reshape(1, nx))
    return out.reshape(orig_shape)


# ----------------------------------------------------------------------------
# Pure-JAX reference (torch semantics: std(unbiased=False)**2 == population var)
# ----------------------------------------------------------------------------
def _reference(x, weight, eps=1e-05):
    xf = x.astype(jnp.float32)
    var = jnp.var(xf, axis=-1, keepdims=True)
    return (xf / jnp.sqrt(var + eps) * weight.astype(jnp.float32)).astype(x.dtype)


if __name__ == "__main__":
    key = jax.random.PRNGKey(0)
    kx, kw, kx2, kw2, kx3, kw3 = jax.random.split(key, 6)

    # Case 1: small-nx lane-packed path, rows divisible by g
    #         (batch=2, seq=8, hidden=32 -> g=4, packed width 128).
    nx = 32
    x = jax.random.normal(kx, (2, 8, nx), dtype=jnp.float32)
    weight = jax.random.normal(kw, (nx,), dtype=jnp.float32)  # torch.Tensor(nx) is uninit; use synthetic
    out = jax.block_until_ready(ln_mod_forward(x, weight))
    ref = _reference(x, weight)
    assert out.shape == x.shape
    assert jnp.allclose(out, ref, atol=2e-5, rtol=2e-5)

    # Case 2: nx=48 -> g=8, width=384; rows=18 not divisible by g -> pad path.
    nx2 = 48
    x_b = jax.random.normal(kx2, (3, 6, nx2), dtype=jnp.float32)
    w_b = jax.random.normal(kw2, (nx2,), dtype=jnp.float32)
    out_b = jax.block_until_ready(ln_mod_forward(x_b, w_b))
    ref_b = _reference(x_b, w_b)
    assert out_b.shape == x_b.shape
    assert jnp.allclose(out_b, ref_b, atol=2e-5, rtol=2e-5)

    # Case 3: general path with an already lane-dense nx (multiple of 128).
    nx3 = 256
    x_c = jax.random.normal(kx3, (2, 4, nx3), dtype=jnp.float32)
    w_c = jax.random.normal(kw3, (nx3,), dtype=jnp.float32)
    out_c = jax.block_until_ready(ln_mod_forward(x_c, w_c))
    ref_c = _reference(x_c, w_c)
    assert out_c.shape == x_c.shape
    assert jnp.allclose(out_c, ref_c, atol=2e-5, rtol=2e-5)

    print("KERNEL_OK")
</pallas_src>

<mosaic_0001>
module attributes {stable_mosaic.version = 11 : i64} {
  func.func @_ln_mod_packed_kernel(%arg0: i32, %arg1: memref<4x128xf32, #tpu.memory_space<vmem>>, %arg2: memref<1x128xf32, #tpu.memory_space<vmem>>, %arg3: memref<128x128xbf16, #tpu.memory_space<vmem>>, %arg4: memref<4x128xf32, #tpu.memory_space<vmem>>) attributes {dimension_semantics = [#tpu.dimension_semantics<parallel>], iteration_bounds = array<i64: 1>, scalar_prefetch = 0 : i64, scratch_operands = 0 : i64, tpu.core_type = #tpu.core_type<tc>, window_params = [{transform_indices = @transform_0, window_bounds = array<i64: 4, 128>}, {pipeline_mode = #tpu.pipeline_mode<synchronous>, transform_indices = @transform_1, window_bounds = array<i64: 1, 128>}, {pipeline_mode = #tpu.pipeline_mode<synchronous>, transform_indices = @transform_2, window_bounds = array<i64: 128, 128>}, {transform_indices = @transform_3, window_bounds = array<i64: 4, 128>}]} {
    %c0 = arith.constant 0 : index
    %c0_0 = arith.constant 0 : index
    %0 = vector.load %arg1[%c0, %c0_0] : memref<4x128xf32, #tpu.memory_space<vmem>>, vector<4x128xf32>
    %c0_1 = arith.constant 0 : index
    %c0_2 = arith.constant 0 : index
    %1 = vector.load %arg2[%c0_1, %c0_2] : memref<1x128xf32, #tpu.memory_space<vmem>>, vector<1x128xf32>
    %c0_3 = arith.constant 0 : index
    %c0_4 = arith.constant 0 : index
    %2 = vector.load %arg3[%c0_3, %c0_4] : memref<128x128xbf16, #tpu.memory_space<vmem>>, vector<128x128xbf16>
    %3 = arith.truncf %0 : vector<4x128xf32> to vector<4x128xbf16>
    %4 = arith.extf %3 : vector<4x128xbf16> to vector<4x128xf32>
    %5 = arith.subf %0, %4 : vector<4x128xf32>
    %6 = arith.truncf %5 : vector<4x128xf32> to vector<4x128xbf16>
    %7 = arith.extf %6 : vector<4x128xbf16> to vector<4x128xf32>
    %8 = arith.subf %5, %7 : vector<4x128xf32>
    %9 = arith.truncf %8 : vector<4x128xf32> to vector<4x128xbf16>
    %cst = arith.constant dense<0.000000e+00> : vector<4x128xf32>
    %10 = tpu.matmul %3, %2, %cst {dimension_numbers = #tpu.dot_dimension_numbers<[1], [0], [0], [1], [0, 0, 1, 1], [], []>} : vector<4x128xbf16>, vector<128x128xbf16>, vector<4x128xf32> -> vector<4x128xf32>
    %cst_5 = arith.constant dense<0.000000e+00> : vector<4x128xf32>
    %11 = tpu.matmul %6, %2, %cst_5 {dimension_numbers = #tpu.dot_dimension_numbers<[1], [0], [0], [1], [0, 0, 1, 1], [], []>} : vector<4x128xbf16>, vector<128x128xbf16>, vector<4x128xf32> -> vector<4x128xf32>
    %12 = arith.addf %10, %11 : vector<4x128xf32>
    %cst_6 = arith.constant dense<0.000000e+00> : vector<4x128xf32>
    %13 = tpu.matmul %9, %2, %cst_6 {dimension_numbers = #tpu.dot_dimension_numbers<[1], [0], [0], [1], [0, 0, 1, 1], [], []>} : vector<4x128xbf16>, vector<128x128xbf16>, vector<4x128xf32> -> vector<4x128xf32>
    %14 = arith.addf %12, %13 : vector<4x128xf32>
    %cst_7 = arith.constant 3.125000e-02 : f32
    %15 = vector.broadcast %cst_7 : f32 to vector<4x128xf32>
    %16 = arith.mulf %14, %15 : vector<4x128xf32>
    %17 = arith.mulf %0, %0 : vector<4x128xf32>
    %18 = arith.truncf %17 : vector<4x128xf32> to vector<4x128xbf16>
    %19 = arith.extf %18 : vector<4x128xbf16> to vector<4x128xf32>
    %20 = arith.subf %17, %19 : vector<4x128xf32>
    %21 = arith.truncf %20 : vector<4x128xf32> to vector<4x128xbf16>
    %22 = arith.extf %21 : vector<4x128xbf16> to vector<4x128xf32>
    %23 = arith.subf %20, %22 : vector<4x128xf32>
    %24 = arith.truncf %23 : vector<4x128xf32> to vector<4x128xbf16>
    %cst_8 = arith.constant dense<0.000000e+00> : vector<4x128xf32>
    %25 = tpu.matmul %18, %2, %cst_8 {dimension_numbers = #tpu.dot_dimension_numbers<[1], [0], [0], [1], [0, 0, 1, 1], [], []>} : vector<4x128xbf16>, vector<128x128xbf16>, vector<4x128xf32> -> vector<4x128xf32>
    %cst_9 = arith.constant dense<0.000000e+00> : vector<4x128xf32>
    %26 = tpu.matmul %21, %2, %cst_9 {dimension_numbers = #tpu.dot_dimension_numbers<[1], [0], [0], [1], [0, 0, 1, 1], [], []>} : vector<4x128xbf16>, vector<128x128xbf16>, vector<4x128xf32> -> vector<4x128xf32>
    %27 = arith.addf %25, %26 : vector<4x128xf32>
    %cst_10 = arith.constant dense<0.000000e+00> : vector<4x128xf32>
    %28 = tpu.matmul %24, %2, %cst_10 {dimension_numbers = #tpu.dot_dimension_numbers<[1], [0], [0], [1], [0, 0, 1, 1], [], []>} : vector<4x128xbf16>, vector<128x128xbf16>, vector<4x128xf32> -> vector<4x128xf32>
    %29 = arith.addf %27, %28 : vector<4x128xf32>
    %cst_11 = arith.constant 3.125000e-02 : f32
    %30 = vector.broadcast %cst_11 : f32 to vector<4x128xf32>
    %31 = arith.mulf %29, %30 : vector<4x128xf32>
    %32 = arith.mulf %16, %16 : vector<4x128xf32>
    %33 = arith.subf %31, %32 : vector<4x128xf32>
    %cst_12 = arith.constant 0.000000e+00 : f32
    %34 = vector.broadcast %cst_12 : f32 to vector<4x128xf32>
    %35 = arith.maximumf %33, %34 : vector<4x128xf32>
    %cst_13 = arith.constant 9.99999974E-6 : f32
    %36 = vector.broadcast %cst_13 : f32 to vector<4x128xf32>
    %37 = arith.addf %35, %36 : vector<4x128xf32>
    %38 = math.rsqrt %37 : vector<4x128xf32>
    %39 = arith.mulf %0, %38 : vector<4x128xf32>
    %40 = vector.broadcast %1 : vector<1x128xf32> to vector<4x128xf32>
    %41 = arith.mulf %39, %40 : vector<4x128xf32>
    %c0_14 = arith.constant 0 : index
    %c0_15 = arith.constant 0 : index
    %42 = vector.load %arg4[%c0_14, %c0_15] : memref<4x128xf32, #tpu.memory_space<vmem>>, vector<4x128xf32>
    tpu.vector_store %arg4[%c0_14, %c0_15], %41 {strides = array<i32>} : memref<4x128xf32, #tpu.memory_space<vmem>>, vector<4x128xf32>,
    return
  }
  func.func @transform_0(%arg0: i32) -> (i32, i32) {
    %c0_i32 = arith.constant 0 : i32
    %c0_i32_0 = arith.constant 0 : i32
    return %arg0, %c0_i32 : i32, i32
  }
  func.func @transform_1(%arg0: i32) -> (i32, i32) {
    %c0_i32 = arith.constant 0 : i32
    %c0_i32_0 = arith.constant 0 : i32
    %c0_i32_1 = arith.constant 0 : i32
    return %c0_i32, %c0_i32_0 : i32, i32
  }
  func.func @transform_2(%arg0: i32) -> (i32, i32) {
    %c0_i32 = arith.constant 0 : i32
    %c0_i32_0 = arith.constant 0 : i32
    %c0_i32_1 = arith.constant 0 : i32
    return %c0_i32, %c0_i32_0 : i32, i32
  }
  func.func @transform_3(%arg0: i32) -> (i32, i32) {
    %c0_i32 = arith.constant 0 : i32
    %c0_i32_0 = arith.constant 0 : i32
    return %arg0, %c0_i32 : i32, i32
  }
}

</mosaic_0001>

<llo_original>
// kernel: tpu_custom_call.1
$region0: #{tpu_custom_call.1}
  #allocation0 [shape = 'u32[]', space=smem, size = 0x4, offset = 0x4, fixed_abs, tag = 'smem constant byte address 0x4 - core index']
  #allocation1 [shape = 'u32[144,128]{1,0:T(1,128)}', space=vmem, size = 0x12000, scoped, tag = 'internal scratch']
  %s0 = inlined_call_operand.hbm [shape: f32[4,128], index: 0, kind: input, shape index: {}]
  %s1 = inlined_call_operand.vmem [shape: f32[1,128], index: 1, kind: input, shape index: {}]
  %s2 = inlined_call_operand.hbm [shape: bf16[128,128], index: 2, kind: input, shape index: {}]
  %s3 = inlined_call_operand.hbm [shape: f32[4,128], index: 3, kind: output, shape index: {}]
  %s4 = sld [smem:[#allocation0]]
  $region30: #{tpu_custom_call.1} parent=0
    _
  %s6 = ssub.s32 1, %s4
  %s7 = scalar_select 0, %s6, %s4
  $region1: #{tpu_custom_call.1} parent=0
    #allocation2 [shape = 'u8[2048]{0}', space=vmem, size = 0x800, scoped, tag = 'input window, operand 0, single buffered']
    #allocation3 [shape = 's32[1]{0}', space=sflag, size = 0x4, scoped, tag = 'scoped memory for tpu_custom_call.1']
    #allocation4 [shape = 's32[1]{0}', space=sflag, size = 0x4, scoped, tag = 'scoped memory for tpu_custom_call.1']
    #allocation5 [shape = 'u8[32768]{0}', space=vmem, size = 0x8000, scoped, tag = 'input window, operand 2, single buffered']
    #allocation6 [shape = 's32[1]{0}', space=sflag, size = 0x4, scoped, tag = 'scoped memory for tpu_custom_call.1']
    #allocation7 [shape = 'u8[2048]{0}', space=vmem, size = 0x800, scoped, tag = 'output window, operand 0, single buffered']
    %8 = vsyncpa [#allocation3], 0
    %9 = vsyncpa [#allocation6], 0
    %10 = vsyncpa [#allocation4], 0
    // Predicated region
    $region2: #{tpu_custom_call.1} parent=1 // pred_check
      _
    $region3: #{tpu_custom_call.1} parent=1 // pred_check_branch
      %12 = sbr.rel (0) target = $region5
    $region4: #{tpu_custom_call.1} parent=1 // pred_region
      %s14 = ssub.s32 64, 64
      %15 = vsyncadd [#allocation3], %s14
      %s17 = sshll.u32 [#allocation2], 4
      %s18 = int_to_ptr.vmem [resolvable:$true] %s17
      %20 = dma.hbm_to_vmem [thread:$0]  %s0, 64, %s18, [#allocation3]
    $region5: #{tpu_custom_call.1} parent=1 // pred_fallthru
      _
    // Predicated region
    $region6: #{tpu_custom_call.1} parent=1 // pred_check
      _
    $region7: #{tpu_custom_call.1} parent=1 // pred_check_branch
      %22 = sbr.rel (0) target = $region9
    $region8: #{tpu_custom_call.1} parent=1 // pred_region
      _
    $region9: #{tpu_custom_call.1} parent=1 // pred_fallthru
      _
    // Predicated region
    $region10: #{tpu_custom_call.1} parent=1 // pred_check
      _
    $region11: #{tpu_custom_call.1} parent=1 // pred_check_branch
      %24 = sbr.rel (0) target = $region13
    $region12: #{tpu_custom_call.1} parent=1 // pred_region
      %s26 = ssub.s32 1024, 1024
      %27 = vsyncadd [#allocation6], %s26
      %s28 = sshll.u32 [#allocation5], 4
      %s29 = int_to_ptr.vmem [resolvable:$true] %s28
      %34 = dma.hbm_to_vmem [thread:$0]  %s2, 1024, %s29, [#allocation6], 64, 64, 4
    $region13: #{tpu_custom_call.1} parent=1 // pred_fallthru
      _
    // Predicated region
    $region14: #{tpu_custom_call.1} parent=1 // pred_check
      _
    $region15: #{tpu_custom_call.1} parent=1 // pred_check_branch
      %36 = sbr.rel (0) target = $region17
    $region16: #{tpu_custom_call.1} parent=1 // pred_region
      %37 = dma.done [#allocation3], 64
    $region17: #{tpu_custom_call.1} parent=1 // pred_fallthru
      _
    // Predicated region
    $region18: #{tpu_custom_call.1} parent=1 // pred_check
      _
    $region19: #{tpu_custom_call.1} parent=1 // pred_check_branch
      %39 = sbr.rel (0) target = $region21
    $region20: #{tpu_custom_call.1} parent=1 // pred_region
      %40 = dma.done [#allocation6], 1024
    $region21: #{tpu_custom_call.1} parent=1 // pred_fallthru
      _
    %v42 = vld [vmem:[#allocation2] sm:$0xf]
    %v43 = vld [vmem:[%s1] sm:$0x1]
    %v44 = vld [vmem:[#allocation5] sm:$0xf]
    %v45 = vld [vmem:[#allocation5 + $0x4] sm:$0xf]
    %v46 = vld [vmem:[#allocation5 + $0x8] sm:$0xf]
    %v47 = vld [vmem:[#allocation5 + $0xc] sm:$0xf]
    %v48 = vld [vmem:[#allocation5 + $0x10] sm:$0xf]
    %v49 = vld [vmem:[#allocation5 + $0x14] sm:$0xf]
    %v50 = vld [vmem:[#allocation5 + $0x18] sm:$0xf]
    %v51 = vld [vmem:[#allocation5 + $0x1c] sm:$0xf]
    %v52 = vld [vmem:[#allocation5 + $0x20] sm:$0xf]
    %v53 = vld [vmem:[#allocation5 + $0x24] sm:$0xf]
    %v54 = vld [vmem:[#allocation5 + $0x28] sm:$0xf]
    %v55 = vld [vmem:[#allocation5 + $0x2c] sm:$0xf]
    %v56 = vld [vmem:[#allocation5 + $0x30] sm:$0xf]
    %v57 = vld [vmem:[#allocation5 + $0x34] sm:$0xf]
    %v58 = vld [vmem:[#allocation5 + $0x38] sm:$0xf]
    %v59 = vld [vmem:[#allocation5 + $0x3c] sm:$0xf]
    %v60 = vpack.c.bf16 %v42, %v42
    %v61 = vunpack.c.l.bf16 %v60
    %v62 = vsub.f32 %v42, %v61
    %v63 = vpack.c.bf16 %v62, %v62
    %v64 = vunpack.c.l.bf16 %v63
    %v65 = vsub.f32 %v62, %v64
    %v66 = vpack.c.bf16 %v65, %v65
    %v83 = vunpack.c.l.b16 %v44
    %v84 = vunpack.c.l.b16 %v45
    %v85 = vunpack.c.l.b16 %v46
    %v86 = vunpack.c.l.b16 %v47
    %v87 = vunpack.c.l.b16 %v48
    %v88 = vunpack.c.l.b16 %v49
    %v89 = vunpack.c.l.b16 %v50
    %v90 = vunpack.c.l.b16 %v51
    %v91 = vunpack.c.l.b16 %v52
    %v92 = vunpack.c.l.b16 %v53
    %v93 = vunpack.c.l.b16 %v54
    %v94 = vunpack.c.l.b16 %v55
    %v95 = vunpack.c.l.b16 %v56
    %v96 = vunpack.c.l.b16 %v57
    %v97 = vunpack.c.l.b16 %v58
    %v98 = vunpack.c.l.b16 %v59
    %v99 = vpack.c.b16 %v84, %v83
    %v100 = vpack.c.b16 %v86, %v85
    %v101 = vpack.c.b16 %v88, %v87
    %v102 = vpack.c.b16 %v90, %v89
    %v103 = vpack.c.b16 %v92, %v91
    %v104 = vpack.c.b16 %v94, %v93
    %v105 = vpack.c.b16 %v96, %v95
    %v106 = vpack.c.b16 %v98, %v97
    %115 = vmatprep.subr.bf16.mxu0 0
    %116 = vmatpush1.bf16.msra.mxu0 %v106
    %117 = vmatprep.subr.bf16.mxu0 0
    %118 = vmatpush1.bf16.msra.mxu0 %v105
    %119 = vmatprep.subr.bf16.mxu0 0
    %120 = vmatpush1.bf16.msra.mxu0 %v104
    %121 = vmatprep.subr.bf16.mxu0 0
    %122 = vmatpush1.bf16.msra.mxu0 %v103
    %123 = vmatprep.subr.bf16.mxu0 0
    %124 = vmatpush1.bf16.msra.mxu0 %v102
    %125 = vmatprep.subr.bf16.mxu0 0
    %126 = vmatpush1.bf16.msra.mxu0 %v101
    %127 = vmatprep.subr.bf16.mxu0 0
    %128 = vmatpush1.bf16.msra.mxu0 %v100
    %129 = vmatprep.subr.bf16.mxu0 0
    %130 = vmatpush1.bf16.msra.mxu0 %v99
    %131 = vmatprep.subr.bf16.mxu0 0
    %132 = vmatpush2.bf16.msra.mxu0 0
    %133 = vmatprep.subr.bf16.mxu0 0
    %134 = vmatpush2.bf16.msra.mxu0 0
    %135 = vmatprep.subr.bf16.mxu0 0
    %136 = vmatpush2.bf16.msra.mxu0 0
    %137 = vmatprep.subr.bf16.mxu0 0
    %138 = vmatpush2.bf16.msra.mxu0 0
    %139 = vmatprep.subr.bf16.mxu0 0
    %140 = vmatpush2.bf16.msra.mxu0 0
    %141 = vmatprep.subr.bf16.mxu0 0
    %142 = vmatpush2.bf16.msra.mxu0 0
    %143 = vmatprep.subr.bf16.mxu0 0
    %144 = vmatpush2.bf16.msra.mxu0 0
    %145 = vmatprep.subr.bf16.mxu0 0
    %146 = vmatpush2.bf16.msra.mxu0 0
    %147 = vmatprep.mubr.bf16.mxu0 0
    %148 = vmatmul.mubr.bf16.gmra.mxu0 %v63
    %v149 = vpop.f32.mrf.mxu0
    %v150 = vadd.f32 0.0, %v149
    %v151 = vpop.f32.mrf.mxu0
    %v152 = vpop.f32.mrf.mxu0
    %v153 = vpop.f32.mrf.mxu0
    %154 = vdwg.mxu0
    %155 = vmatprep.subr.bf16.mxu0 0
    %156 = vmatpush1.bf16.msra.mxu0 %v106
    %157 = vmatprep.subr.bf16.mxu0 0
    %158 = vmatpush1.bf16.msra.mxu0 %v105
    %159 = vmatprep.subr.bf16.mxu0 0
    %160 = vmatpush1.bf16.msra.mxu0 %v104
    %161 = vmatprep.subr.bf16.mxu0 0
    %162 = vmatpush1.bf16.msra.mxu0 %v103
    %163 = vmatprep.subr.bf16.mxu0 0
    %164 = vmatpush1.bf16.msra.mxu0 %v102
    %165 = vmatprep.subr.bf16.mxu0 0
    %166 = vmatpush1.bf16.msra.mxu0 %v101
    %167 = vmatprep.subr.bf16.mxu0 0
    %168 = vmatpush1.bf16.msra.mxu0 %v100
    %169 = vmatprep.subr.bf16.mxu0 0
    %170 = vmatpush1.bf16.msra.mxu0 %v99
    %171 = vmatprep.subr.bf16.mxu0 0
    %172 = vmatpush2.bf16.msra.mxu0 0
    %173 = vmatprep.subr.bf16.mxu0 0
    %174 = vmatpush2.bf16.msra.mxu0 0
    %175 = vmatprep.subr.bf16.mxu0 0
    %176 = vmatpush2.bf16.msra.mxu0 0
    %177 = vmatprep.subr.bf16.mxu0 0
    %178 = vmatpush2.bf16.msra.mxu0 0
    %179 = vmatprep.subr.bf16.mxu0 0
    %180 = vmatpush2.bf16.msra.mxu0 0
    %181 = vmatprep.subr.bf16.mxu0 0
    %182 = vmatpush2.bf16.msra.mxu0 0
    %183 = vmatprep.subr.bf16.mxu0 0
    %184 = vmatpush2.bf16.msra.mxu0 0
    %185 = vmatprep.subr.bf16.mxu0 0
    %186 = vmatpush2.bf16.msra.mxu0 0
    %187 = vmatprep.mubr.bf16.mxu0 0
    %188 = vmatmul.mubr.bf16.gmra.mxu0 %v60
    %v189 = vpop.f32.mrf.mxu0
    %v190 = vadd.f32 %v150, %v189
    %v191 = vpop.f32.mrf.mxu0
    %v192 = vpop.f32.mrf.mxu0
    %v193 = vpop.f32.mrf.mxu0
    %194 = vdwg.mxu0
    %195 = vmatprep.subr.bf16.mxu0 0
    %196 = vmatpush1.bf16.msra.mxu0 %v106
    %197 = vmatprep.subr.bf16.mxu0 0
    %198 = vmatpush1.bf16.msra.mxu0 %v105
    %199 = vmatprep.subr.bf16.mxu0 0
    %200 = vmatpush1.bf16.msra.mxu0 %v104
    %201 = vmatprep.subr.bf16.mxu0 0
    %202 = vmatpush1.bf16.msra.mxu0 %v103
    %203 = vmatprep.subr.bf16.mxu0 0
    %204 = vmatpush1.bf16.msra.mxu0 %v102
    %205 = vmatprep.subr.bf16.mxu0 0
    %206 = vmatpush1.bf16.msra.mxu0 %v101
    %207 = vmatprep.subr.bf16.mxu0 0
    %208 = vmatpush1.bf16.msra.mxu0 %v100
    %209 = vmatprep.subr.bf16.mxu0 0
    %210 = vmatpush1.bf16.msra.mxu0 %v99
    %211 = vmatprep.subr.bf16.mxu0 0
    %212 = vmatpush2.bf16.msra.mxu0 0
    %213 = vmatprep.subr.bf16.mxu0 0
    %214 = vmatpush2.bf16.msra.mxu0 0
    %215 = vmatprep.subr.bf16.mxu0 0
    %216 = vmatpush2.bf16.msra.mxu0 0
    %217 = vmatprep.subr.bf16.mxu0 0
    %218 = vmatpush2.bf16.msra.mxu0 0
    %219 = vmatprep.subr.bf16.mxu0 0
    %220 = vmatpush2.bf16.msra.mxu0 0
    %221 = vmatprep.subr.bf16.mxu0 0
    %222 = vmatpush2.bf16.msra.mxu0 0
    %223 = vmatprep.subr.bf16.mxu0 0
    %224 = vmatpush2.bf16.msra.mxu0 0
    %225 = vmatprep.subr.bf16.mxu0 0
    %226 = vmatpush2.bf16.msra.mxu0 0
    %227 = vmatprep.mubr.bf16.mxu0 0
    %228 = vmatmul.mubr.bf16.gmra.mxu0 %v66
    %v229 = vpop.f32.mrf.mxu0
    %v230 = vadd.f32 0.0, %v229
    %v231 = vpop.f32.mrf.mxu0
    %v232 = vpop.f32.mrf.mxu0
    %v233 = vpop.f32.mrf.mxu0
    %234 = vdwg.mxu0
    %v235 = vadd.f32 %v190, %v230
    %v236 = vmul.f32 %v235, 0.03125
    %v237 = vmul.f32 %v42, %v42
    %v238 = vpack.c.bf16 %v237, %v237
    %v239 = vunpack.c.l.bf16 %v238
    %v240 = vsub.f32 %v237, %v239
    %v241 = vpack.c.bf16 %v240, %v240
    %v242 = vunpack.c.l.bf16 %v241
    %v243 = vsub.f32 %v240, %v242
    %v244 = vpack.c.bf16 %v243, %v243
    %245 = vmatprep.subr.bf16.mxu0 0
    %246 = vmatpush1.bf16.msra.mxu0 %v106
    %247 = vmatprep.subr.bf16.mxu0 0
    %248 = vmatpush1.bf16.msra.mxu0 %v105
    %249 = vmatprep.subr.bf16.mxu0 0
    %250 = vmatpush1.bf16.msra.mxu0 %v104
    %251 = vmatprep.subr.bf16.mxu0 0
    %252 = vmatpush1.bf16.msra.mxu0 %v103
    %253 = vmatprep.subr.bf16.mxu0 0
    %254 = vmatpush1.bf16.msra.mxu0 %v102
    %255 = vmatprep.subr.bf16.mxu0 0
    %256 = vmatpush1.bf16.msra.mxu0 %v101
    %257 = vmatprep.subr.bf16.mxu0 0
    %258 = vmatpush1.bf16.msra.mxu0 %v100
    %259 = vmatprep.subr.bf16.mxu0 0
    %260 = vmatpush1.bf16.msra.mxu0 %v99
    %261 = vmatprep.subr.bf16.mxu0 0
    %262 = vmatpush2.bf16.msra.mxu0 0
    %263 = vmatprep.subr.bf16.mxu0 0
    %264 = vmatpush2.bf16.msra.mxu0 0
    %265 = vmatprep.subr.bf16.mxu0 0
    %266 = vmatpush2.bf16.msra.mxu0 0
    %267 = vmatprep.subr.bf16.mxu0 0
    %268 = vmatpush2.bf16.msra.mxu0 0
    %269 = vmatprep.subr.bf16.mxu0 0
    %270 = vmatpush2.bf16.msra.mxu0 0
    %271 = vmatprep.subr.bf16.mxu0 0
    %272 = vmatpush2.bf16.msra.mxu0 0
    %273 = vmatprep.subr.bf16.mxu0 0
    %274 = vmatpush2.bf16.msra.mxu0 0
    %275 = vmatprep.subr.bf16.mxu0 0
    %276 = vmatpush2.bf16.msra.mxu0 0
    %277 = vmatprep.mubr.bf16.mxu0 0
    %278 = vmatmul.mubr.bf16.gmra.mxu0 %v241
    %v279 = vpop.f32.mrf.mxu0
    %v280 = vadd.f32 0.0, %v279
    %v281 = vpop.f32.mrf.mxu0
    %v282 = vpop.f32.mrf.mxu0
    %v283 = vpop.f32.mrf.mxu0
    %284 = vdwg.mxu0
    %285 = vmatprep.subr.bf16.mxu0 0
    %286 = vmatpush1.bf16.msra.mxu0 %v106
    %287 = vmatprep.subr.bf16.mxu0 0
    %288 = vmatpush1.bf16.msra.mxu0 %v105
    %289 = vmatprep.subr.bf16.mxu0 0
    %290 = vmatpush1.bf16.msra.mxu0 %v104
    %291 = vmatprep.subr.bf16.mxu0 0
    %292 = vmatpush1.bf16.msra.mxu0 %v103
    %293 = vmatprep.subr.bf16.mxu0 0
    %294 = vmatpush1.bf16.msra.mxu0 %v102
    %295 = vmatprep.subr.bf16.mxu0 0
    %296 = vmatpush1.bf16.msra.mxu0 %v101
    %297 = vmatprep.subr.bf16.mxu0 0
    %298 = vmatpush1.bf16.msra.mxu0 %v100
    %299 = vmatprep.subr.bf16.mxu0 0
    %300 = vmatpush1.bf16.msra.mxu0 %v99
    %301 = vmatprep.subr.bf16.mxu0 0
    %302 = vmatpush2.bf16.msra.mxu0 0
    %303 = vmatprep.subr.bf16.mxu0 0
    %304 = vmatpush2.bf16.msra.mxu0 0
    %305 = vmatprep.subr.bf16.mxu0 0
    %306 = vmatpush2.bf16.msra.mxu0 0
    %307 = vmatprep.subr.bf16.mxu0 0
    %308 = vmatpush2.bf16.msra.mxu0 0
    %309 = vmatprep.subr.bf16.mxu0 0
    %310 = vmatpush2.bf16.msra.mxu0 0
    %311 = vmatprep.subr.bf16.mxu0 0
    %312 = vmatpush2.bf16.msra.mxu0 0
    %313 = vmatprep.subr.bf16.mxu0 0
    %314 = vmatpush2.bf16.msra.mxu0 0
    %315 = vmatprep.subr.bf16.mxu0 0
    %316 = vmatpush2.bf16.msra.mxu0 0
    %317 = vmatprep.mubr.bf16.mxu0 0
    %318 = vmatmul.mubr.bf16.gmra.mxu0 %v238
    %v319 = vpop.f32.mrf.mxu0
    %v320 = vadd.f32 %v280, %v319
    %v321 = vpop.f32.mrf.mxu0
    %v322 = vpop.f32.mrf.mxu0
    %v323 = vpop.f32.mrf.mxu0
    %324 = vdwg.mxu0
    %325 = vmatprep.subr.bf16.mxu0 0
    %326 = vmatpush1.bf16.msra.mxu0 %v106
    %327 = vmatprep.subr.bf16.mxu0 0
    %328 = vmatpush1.bf16.msra.mxu0 %v105
    %329 = vmatprep.subr.bf16.mxu0 0
    %330 = vmatpush1.bf16.msra.mxu0 %v104
    %331 = vmatprep.subr.bf16.mxu0 0
    %332 = vmatpush1.bf16.msra.mxu0 %v103
    %333 = vmatprep.subr.bf16.mxu0 0
    %334 = vmatpush1.bf16.msra.mxu0 %v102
    %335 = vmatprep.subr.bf16.mxu0 0
    %336 = vmatpush1.bf16.msra.mxu0 %v101
    %337 = vmatprep.subr.bf16.mxu0 0
    %338 = vmatpush1.bf16.msra.mxu0 %v100
    %339 = vmatprep.subr.bf16.mxu0 0
    %340 = vmatpush1.bf16.msra.mxu0 %v99
    %341 = vmatprep.subr.bf16.mxu0 0
    %342 = vmatpush2.bf16.msra.mxu0 0
    %343 = vmatprep.subr.bf16.mxu0 0
    %344 = vmatpush2.bf16.msra.mxu0 0
    %345 = vmatprep.subr.bf16.mxu0 0
    %346 = vmatpush2.bf16.msra.mxu0 0
    %347 = vmatprep.subr.bf16.mxu0 0
    %348 = vmatpush2.bf16.msra.mxu0 0
    %349 = vmatprep.subr.bf16.mxu0 0
    %350 = vmatpush2.bf16.msra.mxu0 0
    %351 = vmatprep.subr.bf16.mxu0 0
    %352 = vmatpush2.bf16.msra.mxu0 0
    %353 = vmatprep.subr.bf16.mxu0 0
    %354 = vmatpush2.bf16.msra.mxu0 0
    %355 = vmatprep.subr.bf16.mxu0 0
    %356 = vmatpush2.bf16.msra.mxu0 0
    %357 = vmatprep.mubr.bf16.mxu0 0
    %358 = vmatmul.mubr.bf16.gmra.mxu0 %v244
    %v359 = vpop.f32.mrf.mxu0
    %v360 = vadd.f32 0.0, %v359
    %v361 = vpop.f32.mrf.mxu0
    %v362 = vpop.f32.mrf.mxu0
    %v363 = vpop.f32.mrf.mxu0
    %364 = vdwg.mxu0
    %v365 = vadd.f32 %v320, %v360
    %v366 = vmul.f32 %v365, 0.03125
    %v367 = vmul.f32 %v236, %v236
    %v368 = vsub.f32 %v366, %v367
    %v369 = vmax.f32 %v368, 0.0
    %v370 = vadd.f32 %v369, 1e-05
    %v371 = vrsqrt.pop %v370
    %v372 = vmul.f32 %v42, %v371
    %v374 = vlaneseq
    %v375 = vshrl.u32 %v374, 7
    %v376 = vsub.s32 0, %v375
    %v377 = vrot.slane %v43, %v376
    %v379 = vmul.f32 %v372, %v377
    %380 = vst [vmem:[#allocation7] sm:$0xf] %v379
    // Predicated region
    $region22: #{tpu_custom_call.1} parent=1 // pred_check
      _
    $region23: #{tpu_custom_call.1} parent=1 // pred_check_branch
      %382 = sbr.rel (0) target = $region25
    $region24: #{tpu_custom_call.1} parent=1 // pred_region
      %s384 = ssub.s32 64, 64
      %385 = vsyncadd [#allocation4], %s384
      %s387 = sshll.u32 [#allocation7], 4
      %s388 = int_to_ptr.vmem [resolvable:$true] %s387
      %390 = dma.vmem_to_hbm [thread:$0]  %s388, 64, %s3, [#allocation4]
    $region25: #{tpu_custom_call.1} parent=1 // pred_fallthru
      _
    // Predicated region
    $region26: #{tpu_custom_call.1} parent=1 // pred_check
      _
    $region27: #{tpu_custom_call.1} parent=1 // pred_check_branch
      %392 = sbr.rel (0) target = $region29
    $region28: #{tpu_custom_call.1} parent=1 // pred_region
      %393 = dma.done [#allocation4], 64
    $region29: #{tpu_custom_call.1} parent=1 // pred_fallthru
      _
    %394 = vsyncpa [#allocation3], 1
    %395 = vsyncpa [#allocation6], 1
    %396 = vsyncpa [#allocation4], 1

</llo_original>
